<compile_context>
chip_gen: v7x
topology: tpu7x:2x2x1
jax: 0.10.0
libtpu: 0.0.40
codegen_flags: <defaults>
</compile_context>

<pallas_src>
import functools
import math

import jax
import jax.numpy as jnp
from jax.experimental import pallas as pl
from jax.experimental.pallas import tpu as pltpu


def _round_up(n, m):
    return ((n + m - 1) // m) * m


def _l2_normalize(v, axis):
    # rsqrt (EUP) instead of sqrt+div; tiny floor only guards all-zero rows/cols.
    return v * jax.lax.rsqrt(jnp.maximum(jnp.sum(v * v, axis=axis, keepdims=True), 1e-24))


def _precompute(x, weight, label, t, m):
    """Shared f32 preprocessing (wrapper + reference): normalized operands and the
    cheap O(B*D) per-row target statistics + running-t update."""
    cos_m, sin_m = math.cos(m), math.sin(m)
    threshold = math.cos(math.pi - m)
    mm = math.sin(math.pi - m) * m

    x_n = _l2_normalize(x.astype(jnp.float32), axis=1)        # (B, D)
    w_n = _l2_normalize(weight.astype(jnp.float32), axis=0)   # (D, C), per-class columns

    # Target logit via a gather of the label columns (B columns, not the full matmul).
    w_t_n = w_n[:, label].T                                   # (B, D), already unit-norm
    target_logit = jnp.clip(jnp.sum(x_n * w_t_n, axis=1, keepdims=True), -1.0, 1.0)

    sin_theta = jnp.sqrt(jnp.maximum(1.0 - target_logit * target_logit, 0.0))
    cos_theta_m = target_logit * cos_m - sin_theta * sin_m
    final_target_logit = jnp.where(
        target_logit > threshold, cos_theta_m, target_logit - mm
    )
    # Running stat updated BEFORE the hard-example modulation (matches the module).
    t_new = jnp.mean(target_logit) * 0.01 + (1.0 - 0.01) * jnp.reshape(
        jnp.asarray(t, jnp.float32), ()
    )
    return x_n, w_n, cos_theta_m, final_target_logit, t_new


def _curricular_kernel(x_ref, w_ref, lab_ref, ctm_ref, ftl_ref, t_ref, o_ref, *, s):
    # x_ref: (tb, D) bf16 normalized embeddings; w_ref: (D, tc) bf16 normalized classes.
    cos = jax.lax.dot_general(
        x_ref[...], w_ref[...],
        dimension_numbers=(((1,), (0,)), ((), ())),
        preferred_element_type=jnp.float32,     # bf16 MXU operands, f32 accumulation
    )
    cos = jnp.clip(cos, -1.0, 1.0)

    lab = lab_ref[...]                          # (tb, 1) int32
    ctm = ctm_ref[...]                          # (tb, 1) f32  cos(theta + m) per row
    ftl = ftl_ref[...]                          # (tb, 1) f32  final target logit per row
    t = t_ref[...]                              # (tb, 1) f32  updated running t (broadcast)

    tb, tc = cos.shape
    col0 = pl.program_id(1) * tc                # class offset of this C tile
    class_ids = col0 + jax.lax.broadcasted_iota(jnp.int32, (tb, tc), 1)
    is_target = class_ids == lab                # (tb, tc) bool

    hard = cos > ctm                            # hard-negative mask (broadcast (tb,1))
    out = jnp.where(hard, cos * (t + cos), cos)
    out = jnp.where(is_target, ftl, out)        # scatter of the target logit (overwrites)
    o_ref[...] = (out * s).astype(o_ref.dtype)


def curricular_face(x, weight, label, t, *, m=0.5, s=64.0, tb=128, tc=512,
                    out_dtype=jnp.float32):
    """x: (B, in_features) f32, weight: (in_features, out_features) f32,
    label: (B,) int32, t: running-stat buffer (shape (1,) or scalar).
    Returns (logits (B, out_features), t_new (1,))."""
    B, D = x.shape
    Din, C = weight.shape
    assert D == Din

    x_n, w_n, ctm, ftl, t_new = _precompute(x, weight, label, t, m)

    # Tile sizes: 128-/16-aligned, capped by the (padded) problem size.
    tb = min(tb, _round_up(B, 16))
    tc = min(tc, _round_up(C, 128))
    Bp = _round_up(B, tb)
    Cp = _round_up(C, tc)

    x_b = jnp.pad(x_n.astype(jnp.bfloat16), ((0, Bp - B), (0, 0)))
    w_b = jnp.pad(w_n.astype(jnp.bfloat16), ((0, 0), (0, Cp - C)))
    lab_p = jnp.pad(label.astype(jnp.int32).reshape(B, 1), ((0, Bp - B), (0, 0)),
                    constant_values=-1)
    ctm_p = jnp.pad(ctm, ((0, Bp - B), (0, 0)))
    ftl_p = jnp.pad(ftl, ((0, Bp - B), (0, 0)))
    t_col = jnp.zeros((Bp, 1), jnp.float32) + t_new

    grid = (Bp // tb, Cp // tc)
    kernel = functools.partial(_curricular_kernel, s=float(s))

    out = pl.pallas_call(
        kernel,
        out_shape=jax.ShapeDtypeStruct((Bp, Cp), out_dtype),
        grid=grid,
        in_specs=[
            pl.BlockSpec((tb, D), lambda i, j: (i, 0)),   # normalized embeddings (bf16)
            pl.BlockSpec((D, tc), lambda i, j: (0, j)),   # normalized weight columns (bf16)
            pl.BlockSpec((tb, 1), lambda i, j: (i, 0)),   # labels
            pl.BlockSpec((tb, 1), lambda i, j: (i, 0)),   # cos_theta_m
            pl.BlockSpec((tb, 1), lambda i, j: (i, 0)),   # final_target_logit
            pl.BlockSpec((tb, 1), lambda i, j: (i, 0)),   # updated t (broadcast column)
        ],
        out_specs=pl.BlockSpec((tb, tc), lambda i, j: (i, j)),
        compiler_params=pltpu.CompilerParams(
            dimension_semantics=("parallel", "parallel"),   # no reduction axis; v7x 2-TC
            vmem_limit_bytes=32 * 1024 * 1024,
        ),
    )(x_b, w_b, lab_p, ctm_p, ftl_p, t_col)

    return out[:B, :C], jnp.reshape(t_new, (1,))


def curricular_face_reference(x, weight, label, t, *, m=0.5, s=64.0):
    """Pure-JAX CurricularFace forward. Mirrors the kernel's bf16-operand / f32-accumulate
    cosine numerics so the check is not flaky at the hard-negative mask boundary."""
    x_n, w_n, ctm, ftl, t_new = _precompute(x, weight, label, t, m)
    cos = jax.lax.dot_general(
        x_n.astype(jnp.bfloat16), w_n.astype(jnp.bfloat16),
        dimension_numbers=(((1,), (0,)), ((), ())),
        preferred_element_type=jnp.float32,
    )
    cos = jnp.clip(cos, -1.0, 1.0)
    out = jnp.where(cos > ctm, cos * (t_new + cos), cos)
    B, C = cos.shape
    cls = jax.lax.broadcasted_iota(jnp.int32, (B, C), 1)
    out = jnp.where(cls == label.reshape(B, 1), ftl, out)
    return out * s, jnp.reshape(t_new, (1,))


if __name__ == "__main__":
    key = jax.random.PRNGKey(0)
    k_x, k_w, k_l = jax.random.split(key, 3)

    B = 8               # batch
    in_features = 128   # embedding dim (lane-aligned)
    out_features = 256  # number of classes
    m_param = 0.5
    s_param = 64.0

    x = jax.random.normal(k_x, (B, in_features), dtype=jnp.float32)
    label = jax.random.randint(k_l, (B,), 0, out_features, dtype=jnp.int32)
    # nn.init.normal_(kernel, std=0.01), kernel shape (in_features, out_features)
    weight = 0.01 * jax.random.normal(k_w, (in_features, out_features), dtype=jnp.float32)
    t0 = jnp.zeros((1,), dtype=jnp.float32)   # register_buffer('t', zeros(1))

    out, t_new = curricular_face(x, weight, label, t0, m=m_param, s=s_param)
    out = jax.block_until_ready(out)

    ref_out, ref_t = curricular_face_reference(x, weight, label, t0, m=m_param, s=s_param)

    assert out.shape == (B, out_features)
    assert jnp.allclose(out, ref_out, atol=2e-2, rtol=1e-3), "logits mismatch vs reference"
    assert jnp.allclose(t_new, ref_t, atol=1e-6, rtol=1e-6), "running-t mismatch vs reference"

    print("KERNEL_OK")
</pallas_src>

<mosaic_0001>
module attributes {stable_mosaic.version = 11 : i64} {
  func.func @_curricular_kernel(%arg0: i32, %arg1: i32, %arg2: memref<16x128xbf16, #tpu.memory_space<vmem>>, %arg3: memref<128x256xbf16, #tpu.memory_space<vmem>>, %arg4: memref<16x1xi32, #tpu.memory_space<vmem>>, %arg5: memref<16x1xf32, #tpu.memory_space<vmem>>, %arg6: memref<16x1xf32, #tpu.memory_space<vmem>>, %arg7: memref<16x1xf32, #tpu.memory_space<vmem>>, %arg8: memref<16x256xf32, #tpu.memory_space<vmem>>) attributes {dimension_semantics = [#tpu.dimension_semantics<parallel>, #tpu.dimension_semantics<parallel>], iteration_bounds = array<i64: 1, 1>, scalar_prefetch = 0 : i64, scratch_operands = 0 : i64, tpu.core_type = #tpu.core_type<tc>, window_params = [{transform_indices = @transform_0, window_bounds = array<i64: 16, 128>}, {transform_indices = @transform_1, window_bounds = array<i64: 128, 256>}, {transform_indices = @transform_2, window_bounds = array<i64: 16, 1>}, {transform_indices = @transform_3, window_bounds = array<i64: 16, 1>}, {transform_indices = @transform_4, window_bounds = array<i64: 16, 1>}, {transform_indices = @transform_5, window_bounds = array<i64: 16, 1>}, {transform_indices = @transform_6, window_bounds = array<i64: 16, 256>}]} {
    %c0 = arith.constant 0 : index
    %c0_0 = arith.constant 0 : index
    %0 = vector.load %arg2[%c0, %c0_0] : memref<16x128xbf16, #tpu.memory_space<vmem>>, vector<16x128xbf16>
    %c0_1 = arith.constant 0 : index
    %c0_2 = arith.constant 0 : index
    %1 = vector.load %arg3[%c0_1, %c0_2] : memref<128x256xbf16, #tpu.memory_space<vmem>>, vector<128x256xbf16>
    %cst = arith.constant dense<0.000000e+00> : vector<16x256xf32>
    %2 = tpu.matmul %0, %1, %cst {dimension_numbers = #tpu.dot_dimension_numbers<[1], [0], [0], [1], [0, 0, 1, 1], [], []>} : vector<16x128xbf16>, vector<128x256xbf16>, vector<16x256xf32> -> vector<16x256xf32>
    %cst_3 = arith.constant -1.000000e+00 : f32
    %cst_4 = arith.constant 1.000000e+00 : f32
    %3 = vector.broadcast %cst_3 : f32 to vector<16x256xf32>
    %4 = arith.maximumf %3, %2 : vector<16x256xf32>
    %5 = vector.broadcast %cst_4 : f32 to vector<16x256xf32>
    %6 = arith.minimumf %5, %4 : vector<16x256xf32>
    %c0_5 = arith.constant 0 : index
    %c0_6 = arith.constant 0 : index
    %7 = vector.load %arg4[%c0_5, %c0_6] : memref<16x1xi32, #tpu.memory_space<vmem>>, vector<16x1xi32>
    %c0_7 = arith.constant 0 : index
    %c0_8 = arith.constant 0 : index
    %8 = vector.load %arg5[%c0_7, %c0_8] : memref<16x1xf32, #tpu.memory_space<vmem>>, vector<16x1xf32>
    %c0_9 = arith.constant 0 : index
    %c0_10 = arith.constant 0 : index
    %9 = vector.load %arg6[%c0_9, %c0_10] : memref<16x1xf32, #tpu.memory_space<vmem>>, vector<16x1xf32>
    %c0_11 = arith.constant 0 : index
    %c0_12 = arith.constant 0 : index
    %10 = vector.load %arg7[%c0_11, %c0_12] : memref<16x1xf32, #tpu.memory_space<vmem>>, vector<16x1xf32>
    %c256_i32 = arith.constant 256 : i32
    %11 = arith.muli %arg1, %c256_i32 : i32
    %12 = tpu.iota {dimensions = array<i32: 1>} : vector<16x256xi32>
    %13 = vector.broadcast %11 : i32 to vector<16x256xi32>
    %14 = arith.addi %13, %12 : vector<16x256xi32>
    %15 = vector.broadcast %7 : vector<16x1xi32> to vector<16x256xi32>
    %16 = arith.cmpi eq, %14, %15 : vector<16x256xi32>
    %17 = vector.broadcast %8 : vector<16x1xf32> to vector<16x256xf32>
    %18 = arith.cmpf ogt, %6, %17 : vector<16x256xf32>
    %19 = vector.broadcast %10 : vector<16x1xf32> to vector<16x256xf32>
    %20 = arith.addf %19, %6 : vector<16x256xf32>
    %21 = arith.mulf %6, %20 : vector<16x256xf32>
    %22 = arith.select %18, %21, %6 : vector<16x256xi1>, vector<16x256xf32>
    %23 = vector.shape_cast %9 : vector<16x1xf32> to vector<16x1xf32>
    %24 = vector.broadcast %23 : vector<16x1xf32> to vector<16x256xf32>
    %25 = arith.select %16, %24, %22 : vector<16x256xi1>, vector<16x256xf32>
    %cst_13 = arith.constant 6.400000e+01 : f32
    %26 = vector.broadcast %cst_13 : f32 to vector<16x256xf32>
    %27 = arith.mulf %25, %26 : vector<16x256xf32>
    %c0_14 = arith.constant 0 : index
    %c0_15 = arith.constant 0 : index
    %28 = vector.load %arg8[%c0_14, %c0_15] : memref<16x256xf32, #tpu.memory_space<vmem>>, vector<16x256xf32>
    tpu.vector_store %arg8[%c0_14, %c0_15], %27 {strides = array<i32>} : memref<16x256xf32, #tpu.memory_space<vmem>>, vector<16x256xf32>,
    return
  }
  func.func @transform_0(%arg0: i32, %arg1: i32) -> (i32, i32) {
    %c0_i32 = arith.constant 0 : i32
    %c0_i32_0 = arith.constant 0 : i32
    return %arg0, %c0_i32 : i32, i32
  }
  func.func @transform_1(%arg0: i32, %arg1: i32) -> (i32, i32) {
    %c0_i32 = arith.constant 0 : i32
    %c0_i32_0 = arith.constant 0 : i32
    return %c0_i32, %arg1 : i32, i32
  }
  func.func @transform_2(%arg0: i32, %arg1: i32) -> (i32, i32) {
    %c0_i32 = arith.constant 0 : i32
    %c0_i32_0 = arith.constant 0 : i32
    return %arg0, %c0_i32 : i32, i32
  }
  func.func @transform_3(%arg0: i32, %arg1: i32) -> (i32, i32) {
    %c0_i32 = arith.constant 0 : i32
    %c0_i32_0 = arith.constant 0 : i32
    return %arg0, %c0_i32 : i32, i32
  }
  func.func @transform_4(%arg0: i32, %arg1: i32) -> (i32, i32) {
    %c0_i32 = arith.constant 0 : i32
    %c0_i32_0 = arith.constant 0 : i32
    return %arg0, %c0_i32 : i32, i32
  }
  func.func @transform_5(%arg0: i32, %arg1: i32) -> (i32, i32) {
    %c0_i32 = arith.constant 0 : i32
    %c0_i32_0 = arith.constant 0 : i32
    return %arg0, %c0_i32 : i32, i32
  }
  func.func @transform_6(%arg0: i32, %arg1: i32) -> (i32, i32) {
    %c0_i32 = arith.constant 0 : i32
    return %arg0, %arg1 : i32, i32
  }
}

</mosaic_0001>

<llo_original>
// kernel: tpu_custom_call.1
$region0: #{tpu_custom_call.1}
  #allocation0 [shape = 'u32[]', space=smem, size = 0x4, offset = 0x4, fixed_abs, tag = 'smem constant byte address 0x4 - core index']
  #allocation1 [shape = 'u32[144,128]{1,0:T(1,128)}', space=vmem, size = 0x12000, scoped, tag = 'internal scratch']
  %s0 = inlined_call_operand.vmem [shape: bf16[16,128], index: 0, kind: input, shape index: {}]
  %s1 = inlined_call_operand.hbm [shape: bf16[128,256], index: 1, kind: input, shape index: {}]
  %s2 = inlined_call_operand.vmem [shape: s32[16,1], index: 2, kind: input, shape index: {}]
  %s3 = inlined_call_operand.vmem [shape: f32[16,1], index: 3, kind: input, shape index: {}]
  %s4 = inlined_call_operand.vmem [shape: f32[16,1], index: 4, kind: input, shape index: {}]
  %s5 = inlined_call_operand.vmem [shape: f32[16,1], index: 5, kind: input, shape index: {}]
  %s6 = inlined_call_operand.hbm [shape: f32[16,256], index: 6, kind: output, shape index: {}]
  %s7 = sld [smem:[#allocation0]]
  $region38: #{tpu_custom_call.1} parent=0
    _
  %s9 = ssub.s32 1, %s7
  %s10 = scalar_select 0, %s9, %s7
  $region1: #{tpu_custom_call.1} parent=0
    #allocation2 [shape = 'u8[65536]{0}', space=vmem, size = 0x10000, scoped, tag = 'input window, operand 1, single buffered']
    #allocation3 [shape = 's32[1]{0}', space=sflag, size = 0x4, scoped, tag = 'scoped memory for tpu_custom_call.1']
    #allocation4 [shape = 's32[1]{0}', space=sflag, size = 0x4, scoped, tag = 'scoped memory for tpu_custom_call.1']
    #allocation5 [shape = 'u8[16384]{0}', space=vmem, size = 0x4000, scoped, tag = 'output window, operand 0, single buffered']
    %11 = vsyncpa [#allocation3], 0
    %12 = vsyncpa [#allocation4], 0
    // Predicated region
    $region2: #{tpu_custom_call.1} parent=1 // pred_check
      _
    $region3: #{tpu_custom_call.1} parent=1 // pred_check_branch
      %14 = sbr.rel (0) target = $region5
    $region4: #{tpu_custom_call.1} parent=1 // pred_region
      _
    $region5: #{tpu_custom_call.1} parent=1 // pred_fallthru
      _
    // Predicated region
    $region6: #{tpu_custom_call.1} parent=1 // pred_check
      _
    $region7: #{tpu_custom_call.1} parent=1 // pred_check_branch
      %16 = sbr.rel (0) target = $region9
    $region8: #{tpu_custom_call.1} parent=1 // pred_region
      %s18 = ssub.s32 2048, 2048
      %19 = vsyncadd [#allocation3], %s18
      %s20 = sshll.u32 [#allocation2], 4
      %s21 = int_to_ptr.vmem [resolvable:$true] %s20
      %26 = dma.hbm_to_vmem [thread:$0]  %s1, 2048, %s21, [#allocation3], 128, 128, 8
    $region9: #{tpu_custom_call.1} parent=1 // pred_fallthru
      _
    // Predicated region
    $region10: #{tpu_custom_call.1} parent=1 // pred_check
      _
    $region11: #{tpu_custom_call.1} parent=1 // pred_check_branch
      %28 = sbr.rel (0) target = $region13
    $region12: #{tpu_custom_call.1} parent=1 // pred_region
      _
    $region13: #{tpu_custom_call.1} parent=1 // pred_fallthru
      _
    // Predicated region
    $region14: #{tpu_custom_call.1} parent=1 // pred_check
      _
    $region15: #{tpu_custom_call.1} parent=1 // pred_check_branch
      %30 = sbr.rel (0) target = $region17
    $region16: #{tpu_custom_call.1} parent=1 // pred_region
      _
    $region17: #{tpu_custom_call.1} parent=1 // pred_fallthru
      _
    // Predicated region
    $region18: #{tpu_custom_call.1} parent=1 // pred_check
      _
    $region19: #{tpu_custom_call.1} parent=1 // pred_check_branch
      %32 = sbr.rel (0) target = $region21
    $region20: #{tpu_custom_call.1} parent=1 // pred_region
      _
    $region21: #{tpu_custom_call.1} parent=1 // pred_fallthru
      _
    // Predicated region
    $region22: #{tpu_custom_call.1} parent=1 // pred_check
      _
    $region23: #{tpu_custom_call.1} parent=1 // pred_check_branch
      %34 = sbr.rel (0) target = $region25
    $region24: #{tpu_custom_call.1} parent=1 // pred_region
      _
    $region25: #{tpu_custom_call.1} parent=1 // pred_fallthru
      _
    // Predicated region
    $region26: #{tpu_custom_call.1} parent=1 // pred_check
      _
    $region27: #{tpu_custom_call.1} parent=1 // pred_check_branch
      %36 = sbr.rel (0) target = $region29
    $region28: #{tpu_custom_call.1} parent=1 // pred_region
      %37 = dma.done [#allocation3], 2048
    $region29: #{tpu_custom_call.1} parent=1 // pred_fallthru
      _
    %v39 = vld [vmem:[%s0] sm:$0xf]
    %v40 = vld [vmem:[%s0 + $0x4] sm:$0xf]
    %v41 = vld [vmem:[#allocation2] sm:$0xff]
    %v42 = vld [vmem:[#allocation2 + $0x8] sm:$0xff]
    %v43 = vld [vmem:[#allocation2 + $0x10] sm:$0xff]
    %v44 = vld [vmem:[#allocation2 + $0x18] sm:$0xff]
    %v45 = vld [vmem:[#allocation2 + $0x20] sm:$0xff]
    %v46 = vld [vmem:[#allocation2 + $0x28] sm:$0xff]
    %v47 = vld [vmem:[#allocation2 + $0x30] sm:$0xff]
    %v48 = vld [vmem:[#allocation2 + $0x38] sm:$0xff]
    %v49 = vld [vmem:[#allocation2 + $0x40] sm:$0xff]
    %v50 = vld [vmem:[#allocation2 + $0x48] sm:$0xff]
    %v51 = vld [vmem:[#allocation2 + $0x50] sm:$0xff]
    %v52 = vld [vmem:[#allocation2 + $0x58] sm:$0xff]
    %v53 = vld [vmem:[#allocation2 + $0x60] sm:$0xff]
    %v54 = vld [vmem:[#allocation2 + $0x68] sm:$0xff]
    %v55 = vld [vmem:[#allocation2 + $0x70] sm:$0xff]
    %v56 = vld [vmem:[#allocation2 + $0x78] sm:$0xff]
    %v59 = vunpack.c.l.b16 %v39
    %v60 = vunpack.c.l.b16 %v40
    %v61 = vpack.c.b16 %v60, %v59
    %v79 = vunpack.c.l.b16 %v41
    %v80 = vunpack.c.h.b16 %v41
    %v81 = vunpack.c.l.b16 %v42
    %v82 = vunpack.c.h.b16 %v42
    %v83 = vunpack.c.l.b16 %v43
    %v84 = vunpack.c.h.b16 %v43
    %v85 = vunpack.c.l.b16 %v44
    %v86 = vunpack.c.h.b16 %v44
    %v87 = vunpack.c.l.b16 %v45
    %v88 = vunpack.c.h.b16 %v45
    %v89 = vunpack.c.l.b16 %v46
    %v90 = vunpack.c.h.b16 %v46
    %v91 = vunpack.c.l.b16 %v47
    %v92 = vunpack.c.h.b16 %v47
    %v93 = vunpack.c.l.b16 %v48
    %v94 = vunpack.c.h.b16 %v48
    %v95 = vunpack.c.l.b16 %v49
    %v96 = vunpack.c.h.b16 %v49
    %v97 = vunpack.c.l.b16 %v50
    %v98 = vunpack.c.h.b16 %v50
    %v99 = vunpack.c.l.b16 %v51
    %v100 = vunpack.c.h.b16 %v51
    %v101 = vunpack.c.l.b16 %v52
    %v102 = vunpack.c.h.b16 %v52
    %v103 = vunpack.c.l.b16 %v53
    %v104 = vunpack.c.h.b16 %v53
    %v105 = vunpack.c.l.b16 %v54
    %v106 = vunpack.c.h.b16 %v54
    %v107 = vunpack.c.l.b16 %v55
    %v108 = vunpack.c.h.b16 %v55
    %v109 = vunpack.c.l.b16 %v56
    %v110 = vunpack.c.h.b16 %v56
    %v111 = vpack.c.b16 %v81, %v79
    %v112 = vpack.c.b16 %v82, %v80
    %v113 = vpack.c.b16 %v85, %v83
    %v114 = vpack.c.b16 %v86, %v84
    %v115 = vpack.c.b16 %v89, %v87
    %v116 = vpack.c.b16 %v90, %v88
    %v117 = vpack.c.b16 %v93, %v91
    %v118 = vpack.c.b16 %v94, %v92
    %v119 = vpack.c.b16 %v97, %v95
    %v120 = vpack.c.b16 %v98, %v96
    %v121 = vpack.c.b16 %v101, %v99
    %v122 = vpack.c.b16 %v102, %v100
    %v123 = vpack.c.b16 %v105, %v103
    %v124 = vpack.c.b16 %v106, %v104
    %v125 = vpack.c.b16 %v109, %v107
    %v126 = vpack.c.b16 %v110, %v108
    %143 = vmatprep.subr.bf16.mxu0 %v112
    %144 = vmatpush1.bf16.msra.mxu0 %v111
    %145 = vmatprep.subr.bf16.mxu0 %v114
    %146 = vmatpush1.bf16.msra.mxu0 %v113
    %147 = vmatprep.subr.bf16.mxu0 %v116
    %148 = vmatpush1.bf16.msra.mxu0 %v115
    %149 = vmatprep.subr.bf16.mxu0 %v118
    %150 = vmatpush1.bf16.msra.mxu0 %v117
    %151 = vmatprep.subr.bf16.mxu0 %v120
    %152 = vmatpush1.bf16.msra.mxu0 %v119
    %153 = vmatprep.subr.bf16.mxu0 %v122
    %154 = vmatpush1.bf16.msra.mxu0 %v121
    %155 = vmatprep.subr.bf16.mxu0 %v124
    %156 = vmatpush1.bf16.msra.mxu0 %v123
    %157 = vmatprep.subr.bf16.mxu0 %v126
    %158 = vmatpush1.bf16.msra.mxu0 %v125
    %159 = vmatprep.subr.bf16.mxu0 0
    %160 = vmatpush1.bf16.msra.mxu0 0
    %161 = vmatprep.subr.bf16.mxu0 0
    %162 = vmatpush1.bf16.msra.mxu0 0
    %163 = vmatprep.subr.bf16.mxu0 0
    %164 = vmatpush1.bf16.msra.mxu0 0
    %165 = vmatprep.subr.bf16.mxu0 0
    %166 = vmatpush1.bf16.msra.mxu0 0
    %167 = vmatprep.subr.bf16.mxu0 0
    %168 = vmatpush1.bf16.msra.mxu0 0
    %169 = vmatprep.subr.bf16.mxu0 0
    %170 = vmatpush1.bf16.msra.mxu0 0
    %171 = vmatprep.subr.bf16.mxu0 0
    %172 = vmatpush1.bf16.msra.mxu0 0
    %173 = vmatprep.subr.bf16.mxu0 0
    %174 = vmatpush1.bf16.msra.mxu0 0
    %175 = vmatprep.mubr.bf16.mxu0 0
    %176 = vmatmul.mubr.bf16.gmra.mrb[0].mxu0 %v61
    %v177 = vpop.f32.mrb[0].mxu0
    %v178 = vadd.f32 0.0, %v177
    %v179 = vpop.f32.mrb[0].mxu0
    %v180 = vadd.f32 0.0, %v179
    %v181 = vpop.f32.mrb[0].mxu0
    %v182 = vadd.f32 0.0, %v181
    %v183 = vpop.f32.mrb[0].mxu0
    %v184 = vadd.f32 0.0, %v183
    %185 = vdwg.mxu0
    %v186 = vmax.f32 %v178, -1.0
    %v187 = vmax.f32 %v180, -1.0
    %v188 = vmax.f32 %v182, -1.0
    %v189 = vmax.f32 %v184, -1.0
    %v190 = vmin.f32 %v186, 1.0
    %v191 = vmin.f32 %v187, 1.0
    %v192 = vmin.f32 %v188, 1.0
    %v193 = vmin.f32 %v189, 1.0
    %v194 = vld [vmem:[%s2] sm:$0xff]
    %v195 = vld [vmem:[%s2 + $0x8] sm:$0xff]
    %v196 = vld [vmem:[%s3] sm:$0xff]
    %v197 = vld [vmem:[%s3 + $0x8] sm:$0xff]
    %v198 = vld [vmem:[%s4] sm:$0xff]
    %v199 = vld [vmem:[%s4 + $0x8] sm:$0xff]
    %v200 = vld [vmem:[%s5] sm:$0xff]
    %v201 = vld [vmem:[%s5 + $0x8] sm:$0xff]
    %s202 = smul.u32 0, 256
    %v203 = vlaneseq
    %v204 = vand.u32 %v203, 127
    %v205 = vadd.s32 %v204, 128
    %v206 = vstv %s202
    %v207 = vadd.s32 %v206, %v204
    %v208 = vadd.s32 %v206, %v205
    %209 = vset.pattern.permute.xlu0 0
    %210 = vperm.xlu0 %209, %v194
    %v211 = vpop.permute.xlu0 %210
    %212 = vset.pattern.permute.xlu0 0
    %213 = vperm.xlu0 %212, %v195
    %v214 = vpop.permute.xlu0 %213
    %vm215 = vcmp.eq.s32.totalorder %v207, %v211
    %vm216 = vcmp.eq.s32.totalorder %v208, %v211
    %vm217 = vcmp.eq.s32.totalorder %v207, %v214
    %vm218 = vcmp.eq.s32.totalorder %v208, %v214
    %220 = vset.pattern.permute.xlu0 0
    %221 = vperm.xlu0 %220, %v196
    %v222 = vpop.permute.xlu0 %221
    %225 = vset.pattern.permute.xlu0 0
    %226 = vperm.xlu0 %225, %v197
    %v227 = vpop.permute.xlu0 %226
    %vm229 = vcmp.gt.f32.partialorder %v190, %v222
    %vm230 = vcmp.gt.f32.partialorder %v191, %v222
    %vm231 = vcmp.gt.f32.partialorder %v192, %v227
    %vm232 = vcmp.gt.f32.partialorder %v193, %v227
    %234 = vset.pattern.permute.xlu0 0
    %235 = vperm.xlu0 %234, %v200
    %v236 = vpop.permute.xlu0 %235
    %239 = vset.pattern.permute.xlu0 0
    %240 = vperm.xlu0 %239, %v201
    %v241 = vpop.permute.xlu0 %240
    %v243 = vadd.f32 %v236, %v190
    %v244 = vadd.f32 %v236, %v191
    %v245 = vadd.f32 %v241, %v192
    %v246 = vadd.f32 %v241, %v193
    %v247 = vmul.f32 %v190, %v243
    %v248 = vmul.f32 %v191, %v244
    %v249 = vmul.f32 %v192, %v245
    %v250 = vmul.f32 %v193, %v246
    %v251 = vsel %vm229, %v247, %v190
    %v252 = vsel %vm230, %v248, %v191
    %v253 = vsel %vm231, %v249, %v192
    %v254 = vsel %vm232, %v250, %v193
    %256 = vset.pattern.permute.xlu0 0
    %257 = vperm.xlu0 %256, %v198
    %v258 = vpop.permute.xlu0 %257
    %261 = vset.pattern.permute.xlu0 0
    %262 = vperm.xlu0 %261, %v199
    %v263 = vpop.permute.xlu0 %262
    %v265 = vsel %vm215, %v258, %v251
    %v266 = vsel %vm216, %v258, %v252
    %v267 = vsel %vm217, %v263, %v253
    %v268 = vsel %vm218, %v263, %v254
    %v269 = vmul.f32 %v265, 64.0
    %v270 = vmul.f32 %v266, 64.0
    %v271 = vmul.f32 %v267, 64.0
    %v272 = vmul.f32 %v268, 64.0
    %273 = vst [vmem:[#allocation5] sm:$0xff] %v269
    %274 = vst [vmem:[#allocation5 + $0x8] sm:$0xff] %v270
    %275 = vst [vmem:[#allocation5 + $0x10] sm:$0xff] %v271
    %276 = vst [vmem:[#allocation5 + $0x18] sm:$0xff] %v272
    // Predicated region
    $region30: #{tpu_custom_call.1} parent=1 // pred_check
      _
    $region31: #{tpu_custom_call.1} parent=1 // pred_check_branch
      %278 = sbr.rel (0) target = $region33
    $region32: #{tpu_custom_call.1} parent=1 // pred_region
      %s280 = ssub.s32 512, 512
      %281 = vsyncadd [#allocation4], %s280
      %s282 = sshll.u32 [#allocation5], 4
      %s283 = int_to_ptr.vmem [resolvable:$true] %s282
      %288 = dma.vmem_to_hbm [thread:$0]  %s283, 512, %s6, [#allocation4], 256, 256, 16
    $region33: #{tpu_custom_call.1} parent=1 // pred_fallthru
      _
    // Predicated region
    $region34: #{tpu_custom_call.1} parent=1 // pred_check
      _
    $region35: #{tpu_custom_call.1} parent=1 // pred_check_branch
      %290 = sbr.rel (0) target = $region37
    $region36: #{tpu_custom_call.1} parent=1 // pred_region
      %291 = dma.done [#allocation4], 512
    $region37: #{tpu_custom_call.1} parent=1 // pred_fallthru
      _
    %292 = vsyncpa [#allocation3], 1
    %293 = vsyncpa [#allocation4], 1

</llo_original>
